<compile_context>
chip_gen: v7x
topology: tpu7x:2x2x1
jax: 0.10.0
libtpu: 0.0.40
codegen_flags: <defaults>
</compile_context>

<pallas_src>
import functools

import numpy as np
import jax
import jax.numpy as jnp
from jax import lax
from jax.experimental import pallas as pl
from jax.experimental.pallas import tpu as pltpu


_HI_BINS = 128      # code >> 8
_LO_BINS = 256      # code & 255   (128 * 256 = 32^3 bins)


# ----------------------------------------------------------------------------
# shared helpers for the separable convolutions
# ----------------------------------------------------------------------------
def _zero_halo(pad_ref, H, W, P):
    """Zero only the halo frame of the padded scratch; the interior is fully
    overwritten by every separable pass so it never needs clearing."""
    pad_ref[0:P, :] = jnp.zeros((P, W + 2 * P), jnp.float32)
    pad_ref[P + H:, :] = jnp.zeros((P, W + 2 * P), jnp.float32)
    pad_ref[P:P + H, 0:P] = jnp.zeros((H, P), jnp.float32)
    pad_ref[P:P + H, P + W:] = jnp.zeros((H, P), jnp.float32)


def _sep1d(pad_ref, x, taps, axis, H, W, P):
    """1-D 'same' cross-correlation with zero padding along `axis`
    (0 = rows / sublanes, 1 = cols / lanes) using one shared padded VMEM
    scratch whose halo ring is already zero.  Static tap unroll.
    TODO(synk): replace the shifted-slice taps with pltpu.roll + edge masks."""
    pad_ref[P:P + H, P:P + W] = x
    r = (len(taps) - 1) // 2
    acc = None
    for t, wgt in enumerate(taps):
        wgt = float(wgt)
        if wgt == 0.0:
            continue
        off = t - r
        if axis == 0:
            term = pad_ref[P + off:P + off + H, P:P + W]
        else:
            term = pad_ref[P:P + H, P + off:P + off + W]
        if wgt != 1.0:
            term = term * wgt
        acc = term if acc is None else acc + term
    return acc


# ----------------------------------------------------------------------------
# Kernel 1: grayscale -> separable 5x5 avg pool -> separable Sobel -> |grad|
#           (+ per-image max, + clamped quantized color codes)
# ----------------------------------------------------------------------------
def _edge_mag_kernel(img_ref, mag_ref, max_ref, code_ref, pad_ref, *, H, W):
    P = 2
    _zero_halo(pad_ref, H, W, P)

    r = img_ref[0, 0]
    g = img_ref[0, 1]
    b = img_ref[0, 2]

    # quantized 15-bit color code (exact in f32); clamp -> robust to values
    # slightly outside [0,1] (they land on the boundary bins).
    q_r = jnp.clip(jnp.round(r * 31.0), 0.0, 31.0)
    q_g = jnp.clip(jnp.round(g * 31.0), 0.0, 31.0)
    q_b = jnp.clip(jnp.round(b * 31.0), 0.0, 31.0)
    code = q_r * 1024.0 + q_g * 32.0 + q_b
    code_ref[0] = code.astype(jnp.int32)

    gray = 0.299 * r + 0.587 * g + 0.114 * b

    # 5x5 average pool, stride 1, zero pad 2 (count_include_pad -> /25),
    # done separably: 1x5 box then 5x1 box, scaled once.
    box5 = [1.0] * 5
    t = _sep1d(pad_ref, gray, box5, axis=1, H=H, W=W, P=P)
    blurred = _sep1d(pad_ref, t, box5, axis=0, H=H, W=W, P=P) * (1.0 / 25.0)

    # separable Sobel (cross-correlation, zero pad 1):
    #   gx = [1,2,1]^T x [-1,0,1],   gy = [-1,0,1]^T x [1,2,1]
    sx = _sep1d(pad_ref, blurred, [-1.0, 0.0, 1.0], axis=1, H=H, W=W, P=P)
    gx = _sep1d(pad_ref, sx, [1.0, 2.0, 1.0], axis=0, H=H, W=W, P=P)
    sy = _sep1d(pad_ref, blurred, [1.0, 2.0, 1.0], axis=1, H=H, W=W, P=P)
    gy = _sep1d(pad_ref, sy, [-1.0, 0.0, 1.0], axis=0, H=H, W=W, P=P)

    mag = jnp.sqrt(gx * gx + gy * gy)
    mag_ref[0] = mag
    max_ref[...] = jnp.max(mag)[None, None, None]


# ----------------------------------------------------------------------------
# Kernel 2: two-level 32^3-bin histogram — one MXU matmul per pixel tile
#   hist2d[hi, lo] += sum_p onehot_hi[hi, p] * onehot_lo[p, lo]
# ----------------------------------------------------------------------------
def _hist_kernel(codes_row_ref, codes_col_ref, hist_ref, *, np_):
    @pl.when(pl.program_id(0) == 0)
    def _():
        hist_ref[...] = jnp.zeros_like(hist_ref)

    # Same codes, two orientations (free HBM reshape in the wrapper) so no
    # in-kernel transpose / transposed-lhs matmul is needed.
    hi_row = codes_row_ref[...] >> 8        # (1, NP)   int32, padding = -1
    lo_col = codes_col_ref[...] & 255       # (NP, 1)   int32

    iota_hi = lax.broadcasted_iota(jnp.int32, (_HI_BINS, np_), 0)
    iota_lo = lax.broadcasted_iota(jnp.int32, (np_, _LO_BINS), 1)

    # bf16 one-hots are exact (0/1); f32 MXU accumulation keeps counts exact.
    oh_hi_t = jnp.where(hi_row == iota_hi, 1.0, 0.0).astype(jnp.bfloat16)  # (128, NP)
    oh_lo = jnp.where(lo_col == iota_lo, 1.0, 0.0).astype(jnp.bfloat16)    # (NP, 256)

    hist_ref[...] += jnp.dot(oh_hi_t, oh_lo, preferred_element_type=jnp.float32)


# ----------------------------------------------------------------------------
# Kernel 3: band-pass threshold (global max, SMEM scalar) + separable 15-tap
#           Gaussian blur; emits per-image min/max for the global normalization
# ----------------------------------------------------------------------------
def _edge_density_kernel(mag_ref, thr_ref, dens_ref, dmin_ref, dmax_ref,
                         pad_ref, *, H, W, taps):
    P = 7
    _zero_halo(pad_ref, H, W, P)

    hi = thr_ref[0]                                      # SMEM scalar = global max * 0.2
    lo = hi * 0.3
    mag = mag_ref[0]
    edge_map = jnp.where((mag > lo) & (mag < hi), 1.0, 0.0).astype(jnp.float32)

    t = _sep1d(pad_ref, edge_map, taps, axis=1, H=H, W=W, P=P)
    dens = _sep1d(pad_ref, t, taps, axis=0, H=H, W=W, P=P)

    dens_ref[0] = dens
    dmin_ref[...] = jnp.min(dens)[None, None, None]
    dmax_ref[...] = jnp.max(dens)[None, None, None]


# ----------------------------------------------------------------------------
# Kernel 4 (fused): two-level per-pixel histogram lookup -> color sparsity,
#                   min/max normalization (precomputed scalars in SMEM),
#                   sigmoid blend.  No intermediate sparsity map in HBM.
# ----------------------------------------------------------------------------
def _combine_kernel(codes_ref, dens_ref, hist_ref, par_ref, out_ref, *, np_, inv_n):
    codes = codes_ref[...]                               # (NP, 1) int32, padding = -1
    hi = codes >> 8
    lo = codes & 255

    iota_hi = lax.broadcasted_iota(jnp.int32, (np_, _HI_BINS), 1)
    iota_lo = lax.broadcasted_iota(jnp.int32, (np_, _LO_BINS), 1)
    # f32 selector matmul keeps the counts exact (0/1 selector is exact
    # through the MXU f32 path; counts <= N << 2^24).
    oh_hi = jnp.where(hi == iota_hi, 1.0, 0.0)           # (NP, 128) f32
    oh_lo = jnp.where(lo == iota_lo, 1.0, 0.0)           # (NP, 256) f32

    sel = jnp.dot(oh_hi, hist_ref[...], preferred_element_type=jnp.float32)  # (NP, 256)
    count = jnp.sum(sel * oh_lo, axis=1, keepdims=True)                       # (NP, 1)
    cs = -1.5 * jnp.log(count * inv_n + 1e-9)

    alpha = par_ref[0]
    beta = par_ref[1]
    ed_min = par_ref[2]
    ed_inv = par_ref[3]
    cs_min = par_ref[4]
    cs_inv = par_ref[5]

    en = (dens_ref[...] - ed_min) * ed_inv
    cn = (cs - cs_min) * cs_inv
    z = alpha * en + beta * cn
    w = pl.reciprocal(1.0 + jnp.exp(-z), approx=True)    # EUP; clamp guards approx error
    out_ref[...] = jnp.clip(w, 0.0, 1.0)
    # TODO(synk): emit a lane-dense (1, NP) output block (in-kernel transpose)
    # to unmask the stores; irrelevant here since this pass is MXU/VPU bound.


# ----------------------------------------------------------------------------
# Wrapper
# ----------------------------------------------------------------------------
def saliency_region_detector(img, alpha=0.5, beta=0.5):
    """img: (B, 3, H, W) float32 in [0, 1].  Returns W_s: (B, 1, H, W) float32."""
    img = jnp.asarray(img, jnp.float32)
    B, C, H, W = img.shape
    assert C == 3
    N = B * H * W

    # separable 15-tap Gaussian (sigma = 2), normalized to sum 1 per axis
    # (outer product == the reference's normalized 2-D kernel).
    coords = np.arange(15, dtype=np.float64) - 7.0
    g1 = np.exp(-(coords ** 2) / (2.0 * 2.0 ** 2))
    gauss_taps = [float(v) for v in (g1 / g1.sum())]

    par = pltpu.CompilerParams(dimension_semantics=("parallel",))
    arb = pltpu.CompilerParams(dimension_semantics=("arbitrary",))

    # ---- pass 1: edge magnitude + per-image max + quantized color codes ------
    mag, mag_max, codes = pl.pallas_call(
        functools.partial(_edge_mag_kernel, H=H, W=W),
        grid=(B,),
        in_specs=[pl.BlockSpec((1, 3, H, W), lambda b: (b, 0, 0, 0))],
        out_specs=(
            pl.BlockSpec((1, H, W), lambda b: (b, 0, 0)),
            pl.BlockSpec((1, 1, 1), lambda b: (b, 0, 0)),
            pl.BlockSpec((1, H, W), lambda b: (b, 0, 0)),
        ),
        out_shape=(
            jax.ShapeDtypeStruct((B, H, W), jnp.float32),
            jax.ShapeDtypeStruct((B, 1, 1), jnp.float32),
            jax.ShapeDtypeStruct((B, H, W), jnp.int32),
        ),
        scratch_shapes=[pltpu.VMEM((H + 4, W + 4), jnp.float32)],
        compiler_params=par,
    )(img)

    # batch-global edge threshold (matches reference: edge_mag.max() over all)
    thr = (jnp.max(mag_max) * 0.2).astype(jnp.float32).reshape(1)

    # ---- pass 2: threshold + separable Gaussian => edge density --------------
    dens, dmin, dmax = pl.pallas_call(
        functools.partial(_edge_density_kernel, H=H, W=W, taps=gauss_taps),
        grid=(B,),
        in_specs=[
            pl.BlockSpec((1, H, W), lambda b: (b, 0, 0)),
            pl.BlockSpec(memory_space=pltpu.MemorySpace.SMEM),     # scalar thr
        ],
        out_specs=(
            pl.BlockSpec((1, H, W), lambda b: (b, 0, 0)),
            pl.BlockSpec((1, 1, 1), lambda b: (b, 0, 0)),
            pl.BlockSpec((1, 1, 1), lambda b: (b, 0, 0)),
        ),
        out_shape=(
            jax.ShapeDtypeStruct((B, H, W), jnp.float32),
            jax.ShapeDtypeStruct((B, 1, 1), jnp.float32),
            jax.ShapeDtypeStruct((B, 1, 1), jnp.float32),
        ),
        scratch_shapes=[pltpu.VMEM((H + 14, W + 14), jnp.float32)],
        compiler_params=par,
    )(mag, thr)

    # ---- pass 3: two-level (128 x 256) color-code histogram ------------------
    NP = 512                                   # pixels / tile; multiple of 256 (MXU K)
    n_tiles = pl.cdiv(N, NP)
    n_pad = n_tiles * NP

    codes_col = codes.reshape(N, 1)
    if n_pad != N:
        pad = jnp.full((n_pad - N, 1), -1, jnp.int32)   # sentinel: matches no hi bin
        codes_col = jnp.concatenate([codes_col, pad], axis=0)
    codes_row = codes_col.reshape(1, n_pad)             # free HBM reshape

    hist = pl.pallas_call(
        functools.partial(_hist_kernel, np_=NP),
        grid=(n_tiles,),
        in_specs=[
            pl.BlockSpec((1, NP), lambda i: (0, i)),
            pl.BlockSpec((NP, 1), lambda i: (i, 0)),
        ],
        out_specs=pl.BlockSpec((_HI_BINS, _LO_BINS), lambda i: (0, 0)),
        out_shape=jax.ShapeDtypeStruct((_HI_BINS, _LO_BINS), jnp.float32),
        compiler_params=arb,
    )(codes_row, codes_col)
    # TODO(synk): on v7x split this over a leading parallel axis (2 TCs) and
    # sum the partial histograms in the wrapper.

    # ---- global normalization scalars (tiny; no extra full-map reductions) ---
    ed_min = jnp.min(dmin)
    ed_max = jnp.max(dmax)
    inv_n = 1.0 / float(N)
    max_count = jnp.max(hist)
    min_count = jnp.min(jnp.where(hist > 0.5, hist, jnp.float32(np.inf)))
    cs_min = -1.5 * jnp.log(max_count * inv_n + 1e-9)    # sparsity of most frequent color
    cs_max = -1.5 * jnp.log(min_count * inv_n + 1e-9)    # sparsity of rarest present color
    ed_inv = 1.0 / (ed_max - ed_min + 1e-9)
    cs_inv = 1.0 / (cs_max - cs_min + 1e-9)

    params = jnp.stack([
        jnp.float32(alpha), jnp.float32(beta),
        ed_min, ed_inv, cs_min, cs_inv,
    ]).astype(jnp.float32)                               # (6,) -> SMEM

    # ---- pass 4 (fused): sparsity lookup + normalize + sigmoid ----------------
    dens_col = dens.reshape(N, 1)
    if n_pad != N:
        dens_col = jnp.concatenate(
            [dens_col, jnp.zeros((n_pad - N, 1), jnp.float32)], axis=0)

    ws_col = pl.pallas_call(
        functools.partial(_combine_kernel, np_=NP, inv_n=inv_n),
        grid=(n_tiles,),
        in_specs=[
            pl.BlockSpec((NP, 1), lambda i: (i, 0)),
            pl.BlockSpec((NP, 1), lambda i: (i, 0)),
            pl.BlockSpec((_HI_BINS, _LO_BINS), lambda i: (0, 0)),
            pl.BlockSpec(memory_space=pltpu.MemorySpace.SMEM),     # 6 scalars
        ],
        out_specs=pl.BlockSpec((NP, 1), lambda i: (i, 0)),
        out_shape=jax.ShapeDtypeStruct((n_pad, 1), jnp.float32),
        compiler_params=par,
    )(codes_col, dens_col, hist, params)

    w_s = ws_col[:N, 0].reshape(B, H, W)[:, None, :, :]

    # NOTE: the reference also calls _rgb_to_lab(img) inside
    # _compute_color_sparsity but never uses the result (dead code) — omitted.
    return w_s


if __name__ == "__main__":
    key = jax.random.PRNGKey(0)
    img = jax.random.uniform(key, (2, 3, 16, 16), dtype=jnp.float32)

    w_s = saliency_region_detector(img, alpha=0.5, beta=0.5)
    w_s = jax.block_until_ready(w_s)

    assert w_s.shape == (2, 1, 16, 16)
    assert bool(jnp.all(jnp.isfinite(w_s)))
    assert bool(jnp.all((w_s >= 0.0) & (w_s <= 1.0)))
    print("KERNEL_OK")
</pallas_src>

<mosaic_0001>
module attributes {stable_mosaic.version = 11 : i64} {
  func.func @_edge_mag_kernel(%arg0: i32, %arg1: memref<1x3x16x16xf32, #tpu.memory_space<vmem>>, %arg2: memref<1x16x16xf32, #tpu.memory_space<vmem>>, %arg3: memref<1x1x1xf32, #tpu.memory_space<vmem>>, %arg4: memref<1x16x16xi32, #tpu.memory_space<vmem>>, %arg5: memref<20x20xf32, #tpu.memory_space<vmem>>) attributes {dimension_semantics = [#tpu.dimension_semantics<parallel>], iteration_bounds = array<i64: 2>, scalar_prefetch = 0 : i64, scratch_operands = 1 : i64, tpu.core_type = #tpu.core_type<tc>, window_params = [{transform_indices = @transform_0, window_bounds = array<i64: 1, 3, 16, 16>}, {transform_indices = @transform_1, window_bounds = array<i64: 1, 16, 16>}, {transform_indices = @transform_2, window_bounds = array<i64: 1, 1, 1>}, {transform_indices = @transform_3, window_bounds = array<i64: 1, 16, 16>}]} {
    %cst = arith.constant 0.000000e+00 : f32
    %0 = vector.broadcast %cst : f32 to vector<2x20xf32>
    %c0 = arith.constant 0 : index
    %c0_0 = arith.constant 0 : index
    %1 = vector.load %arg5[%c0, %c0_0] : memref<20x20xf32, #tpu.memory_space<vmem>>, vector<2x20xf32>
    tpu.vector_store %arg5[%c0, %c0_0], %0 {strides = array<i32>} : memref<20x20xf32, #tpu.memory_space<vmem>>, vector<2x20xf32>,
    %cst_1 = arith.constant 0.000000e+00 : f32
    %2 = vector.broadcast %cst_1 : f32 to vector<2x20xf32>
    %c18 = arith.constant 18 : index
    %c0_2 = arith.constant 0 : index
    %3 = vector.load %arg5[%c18, %c0_2] : memref<20x20xf32, #tpu.memory_space<vmem>>, vector<2x20xf32>
    tpu.vector_store %arg5[%c18, %c0_2], %2 {strides = array<i32>} : memref<20x20xf32, #tpu.memory_space<vmem>>, vector<2x20xf32>,
    %cst_3 = arith.constant 0.000000e+00 : f32
    %4 = vector.broadcast %cst_3 : f32 to vector<16x2xf32>
    %c2 = arith.constant 2 : index
    %c0_4 = arith.constant 0 : index
    %5 = vector.load %arg5[%c2, %c0_4] : memref<20x20xf32, #tpu.memory_space<vmem>>, vector<16x2xf32>
    tpu.vector_store %arg5[%c2, %c0_4], %4 {strides = array<i32>} : memref<20x20xf32, #tpu.memory_space<vmem>>, vector<16x2xf32>,
    %cst_5 = arith.constant 0.000000e+00 : f32
    %6 = vector.broadcast %cst_5 : f32 to vector<16x2xf32>
    %c2_6 = arith.constant 2 : index
    %c18_7 = arith.constant 18 : index
    %7 = vector.load %arg5[%c2_6, %c18_7] : memref<20x20xf32, #tpu.memory_space<vmem>>, vector<16x2xf32>
    tpu.vector_store %arg5[%c2_6, %c18_7], %6 {strides = array<i32>} : memref<20x20xf32, #tpu.memory_space<vmem>>, vector<16x2xf32>,
    %c0_8 = arith.constant 0 : index
    %c0_9 = arith.constant 0 : index
    %c0_10 = arith.constant 0 : index
    %c0_11 = arith.constant 0 : index
    %8 = vector.load %arg1[%c0_8, %c0_9, %c0_10, %c0_11] : memref<1x3x16x16xf32, #tpu.memory_space<vmem>>, vector<1x1x16x16xf32>
    %9 = vector.shape_cast %8 : vector<1x1x16x16xf32> to vector<16x16xf32>
    %c0_12 = arith.constant 0 : index
    %c1 = arith.constant 1 : index
    %c0_13 = arith.constant 0 : index
    %c0_14 = arith.constant 0 : index
    %10 = vector.load %arg1[%c0_12, %c1, %c0_13, %c0_14] : memref<1x3x16x16xf32, #tpu.memory_space<vmem>>, vector<1x1x16x16xf32>
    %11 = vector.shape_cast %10 : vector<1x1x16x16xf32> to vector<16x16xf32>
    %c0_15 = arith.constant 0 : index
    %c2_16 = arith.constant 2 : index
    %c0_17 = arith.constant 0 : index
    %c0_18 = arith.constant 0 : index
    %12 = vector.load %arg1[%c0_15, %c2_16, %c0_17, %c0_18] : memref<1x3x16x16xf32, #tpu.memory_space<vmem>>, vector<1x1x16x16xf32>
    %13 = vector.shape_cast %12 : vector<1x1x16x16xf32> to vector<16x16xf32>
    %cst_19 = arith.constant 3.100000e+01 : f32
    %14 = vector.broadcast %cst_19 : f32 to vector<16x16xf32>
    %15 = arith.mulf %9, %14 : vector<16x16xf32>
    %16 = math.roundeven %15 : vector<16x16xf32>
    %cst_20 = arith.constant 0.000000e+00 : f32
    %cst_21 = arith.constant 3.100000e+01 : f32
    %17 = vector.broadcast %cst_20 : f32 to vector<16x16xf32>
    %18 = arith.maximumf %17, %16 : vector<16x16xf32>
    %19 = vector.broadcast %cst_21 : f32 to vector<16x16xf32>
    %20 = arith.minimumf %19, %18 : vector<16x16xf32>
    %cst_22 = arith.constant 3.100000e+01 : f32
    %21 = vector.broadcast %cst_22 : f32 to vector<16x16xf32>
    %22 = arith.mulf %11, %21 : vector<16x16xf32>
    %23 = math.roundeven %22 : vector<16x16xf32>
    %cst_23 = arith.constant 0.000000e+00 : f32
    %cst_24 = arith.constant 3.100000e+01 : f32
    %24 = vector.broadcast %cst_23 : f32 to vector<16x16xf32>
    %25 = arith.maximumf %24, %23 : vector<16x16xf32>
    %26 = vector.broadcast %cst_24 : f32 to vector<16x16xf32>
    %27 = arith.minimumf %26, %25 : vector<16x16xf32>
    %cst_25 = arith.constant 3.100000e+01 : f32
    %28 = vector.broadcast %cst_25 : f32 to vector<16x16xf32>
    %29 = arith.mulf %13, %28 : vector<16x16xf32>
    %30 = math.roundeven %29 : vector<16x16xf32>
    %cst_26 = arith.constant 0.000000e+00 : f32
    %cst_27 = arith.constant 3.100000e+01 : f32
    %31 = vector.broadcast %cst_26 : f32 to vector<16x16xf32>
    %32 = arith.maximumf %31, %30 : vector<16x16xf32>
    %33 = vector.broadcast %cst_27 : f32 to vector<16x16xf32>
    %34 = arith.minimumf %33, %32 : vector<16x16xf32>
    %cst_28 = arith.constant 1.024000e+03 : f32
    %35 = vector.broadcast %cst_28 : f32 to vector<16x16xf32>
    %36 = arith.mulf %20, %35 : vector<16x16xf32>
    %cst_29 = arith.constant 3.200000e+01 : f32
    %37 = vector.broadcast %cst_29 : f32 to vector<16x16xf32>
    %38 = arith.mulf %27, %37 : vector<16x16xf32>
    %39 = arith.addf %36, %38 : vector<16x16xf32>
    %40 = arith.addf %39, %34 : vector<16x16xf32>
    %41 = arith.fptosi %40 : vector<16x16xf32> to vector<16x16xi32>
    %c0_30 = arith.constant 0 : index
    %c0_31 = arith.constant 0 : index
    %c0_32 = arith.constant 0 : index
    %42 = vector.load %arg4[%c0_30, %c0_31, %c0_32] : memref<1x16x16xi32, #tpu.memory_space<vmem>>, vector<1x16x16xi32>
    %43 = vector.shape_cast %42 : vector<1x16x16xi32> to vector<16x16xi32>
    %44 = vector.shape_cast %41 : vector<16x16xi32> to vector<1x16x16xi32>
    tpu.vector_store %arg4[%c0_30, %c0_31, %c0_32], %44 {strides = array<i32>} : memref<1x16x16xi32, #tpu.memory_space<vmem>>, vector<1x16x16xi32>,
    %cst_33 = arith.constant 2.990000e-01 : f32
    %45 = vector.broadcast %cst_33 : f32 to vector<16x16xf32>
    %46 = arith.mulf %45, %9 : vector<16x16xf32>
    %cst_34 = arith.constant 5.870000e-01 : f32
    %47 = vector.broadcast %cst_34 : f32 to vector<16x16xf32>
    %48 = arith.mulf %47, %11 : vector<16x16xf32>
    %49 = arith.addf %46, %48 : vector<16x16xf32>
    %cst_35 = arith.constant 1.140000e-01 : f32
    %50 = vector.broadcast %cst_35 : f32 to vector<16x16xf32>
    %51 = arith.mulf %50, %13 : vector<16x16xf32>
    %52 = arith.addf %49, %51 : vector<16x16xf32>
    %c2_36 = arith.constant 2 : index
    %c2_37 = arith.constant 2 : index
    %53 = vector.load %arg5[%c2_36, %c2_37] : memref<20x20xf32, #tpu.memory_space<vmem>>, vector<16x16xf32>
    tpu.vector_store %arg5[%c2_36, %c2_37], %52 {strides = array<i32>} : memref<20x20xf32, #tpu.memory_space<vmem>>, vector<16x16xf32>,
    %c2_38 = arith.constant 2 : index
    %c0_39 = arith.constant 0 : index
    %54 = vector.load %arg5[%c2_38, %c0_39] : memref<20x20xf32, #tpu.memory_space<vmem>>, vector<16x16xf32>
    %c2_40 = arith.constant 2 : index
    %c1_41 = arith.constant 1 : index
    %55 = vector.load %arg5[%c2_40, %c1_41] : memref<20x20xf32, #tpu.memory_space<vmem>>, vector<16x16xf32>
    %56 = arith.addf %54, %55 : vector<16x16xf32>
    %c2_42 = arith.constant 2 : index
    %c2_43 = arith.constant 2 : index
    %57 = vector.load %arg5[%c2_42, %c2_43] : memref<20x20xf32, #tpu.memory_space<vmem>>, vector<16x16xf32>
    %58 = arith.addf %56, %57 : vector<16x16xf32>
    %c2_44 = arith.constant 2 : index
    %c3 = arith.constant 3 : index
    %59 = vector.load %arg5[%c2_44, %c3] : memref<20x20xf32, #tpu.memory_space<vmem>>, vector<16x16xf32>
    %60 = arith.addf %58, %59 : vector<16x16xf32>
    %c2_45 = arith.constant 2 : index
    %c4 = arith.constant 4 : index
    %61 = vector.load %arg5[%c2_45, %c4] : memref<20x20xf32, #tpu.memory_space<vmem>>, vector<16x16xf32>
    %62 = arith.addf %60, %61 : vector<16x16xf32>
    %c2_46 = arith.constant 2 : index
    %c2_47 = arith.constant 2 : index
    %63 = vector.load %arg5[%c2_46, %c2_47] : memref<20x20xf32, #tpu.memory_space<vmem>>, vector<16x16xf32>
    tpu.vector_store %arg5[%c2_46, %c2_47], %62 {strides = array<i32>} : memref<20x20xf32, #tpu.memory_space<vmem>>, vector<16x16xf32>,
    %c0_48 = arith.constant 0 : index
    %c2_49 = arith.constant 2 : index
    %64 = vector.load %arg5[%c0_48, %c2_49] : memref<20x20xf32, #tpu.memory_space<vmem>>, vector<16x16xf32>
    %c1_50 = arith.constant 1 : index
    %c2_51 = arith.constant 2 : index
    %65 = vector.load %arg5[%c1_50, %c2_51] : memref<20x20xf32, #tpu.memory_space<vmem>>, vector<16x16xf32>
    %66 = arith.addf %64, %65 : vector<16x16xf32>
    %c2_52 = arith.constant 2 : index
    %c2_53 = arith.constant 2 : index
    %67 = vector.load %arg5[%c2_52, %c2_53] : memref<20x20xf32, #tpu.memory_space<vmem>>, vector<16x16xf32>
    %68 = arith.addf %66, %67 : vector<16x16xf32>
    %c3_54 = arith.constant 3 : index
    %c2_55 = arith.constant 2 : index
    %69 = vector.load %arg5[%c3_54, %c2_55] : memref<20x20xf32, #tpu.memory_space<vmem>>, vector<16x16xf32>
    %70 = arith.addf %68, %69 : vector<16x16xf32>
    %c4_56 = arith.constant 4 : index
    %c2_57 = arith.constant 2 : index
    %71 = vector.load %arg5[%c4_56, %c2_57] : memref<20x20xf32, #tpu.memory_space<vmem>>, vector<16x16xf32>
    %72 = arith.addf %70, %71 : vector<16x16xf32>
    %cst_58 = arith.constant 4.000000e-02 : f32
    %73 = vector.broadcast %cst_58 : f32 to vector<16x16xf32>
    %74 = arith.mulf %72, %73 : vector<16x16xf32>
    %c2_59 = arith.constant 2 : index
    %c2_60 = arith.constant 2 : index
    %75 = vector.load %arg5[%c2_59, %c2_60] : memref<20x20xf32, #tpu.memory_space<vmem>>, vector<16x16xf32>
    tpu.vector_store %arg5[%c2_59, %c2_60], %74 {strides = array<i32>} : memref<20x20xf32, #tpu.memory_space<vmem>>, vector<16x16xf32>,
    %c2_61 = arith.constant 2 : index
    %c1_62 = arith.constant 1 : index
    %76 = vector.load %arg5[%c2_61, %c1_62] : memref<20x20xf32, #tpu.memory_space<vmem>>, vector<16x16xf32>
    %cst_63 = arith.constant -1.000000e+00 : f32
    %77 = vector.broadcast %cst_63 : f32 to vector<16x16xf32>
    %78 = arith.mulf %76, %77 : vector<16x16xf32>
    %c2_64 = arith.constant 2 : index
    %c3_65 = arith.constant 3 : index
    %79 = vector.load %arg5[%c2_64, %c3_65] : memref<20x20xf32, #tpu.memory_space<vmem>>, vector<16x16xf32>
    %80 = arith.addf %78, %79 : vector<16x16xf32>
    %c2_66 = arith.constant 2 : index
    %c2_67 = arith.constant 2 : index
    %81 = vector.load %arg5[%c2_66, %c2_67] : memref<20x20xf32, #tpu.memory_space<vmem>>, vector<16x16xf32>
    tpu.vector_store %arg5[%c2_66, %c2_67], %80 {strides = array<i32>} : memref<20x20xf32, #tpu.memory_space<vmem>>, vector<16x16xf32>,
    %c1_68 = arith.constant 1 : index
    %c2_69 = arith.constant 2 : index
    %82 = vector.load %arg5[%c1_68, %c2_69] : memref<20x20xf32, #tpu.memory_space<vmem>>, vector<16x16xf32>
    %c2_70 = arith.constant 2 : index
    %c2_71 = arith.constant 2 : index
    %83 = vector.load %arg5[%c2_70, %c2_71] : memref<20x20xf32, #tpu.memory_space<vmem>>, vector<16x16xf32>
    %cst_72 = arith.constant 2.000000e+00 : f32
    %84 = vector.broadcast %cst_72 : f32 to vector<16x16xf32>
    %85 = arith.mulf %83, %84 : vector<16x16xf32>
    %86 = arith.addf %82, %85 : vector<16x16xf32>
    %c3_73 = arith.constant 3 : index
    %c2_74 = arith.constant 2 : index
    %87 = vector.load %arg5[%c3_73, %c2_74] : memref<20x20xf32, #tpu.memory_space<vmem>>, vector<16x16xf32>
    %88 = arith.addf %86, %87 : vector<16x16xf32>
    %c2_75 = arith.constant 2 : index
    %c2_76 = arith.constant 2 : index
    %89 = vector.load %arg5[%c2_75, %c2_76] : memref<20x20xf32, #tpu.memory_space<vmem>>, vector<16x16xf32>
    tpu.vector_store %arg5[%c2_75, %c2_76], %74 {strides = array<i32>} : memref<20x20xf32, #tpu.memory_space<vmem>>, vector<16x16xf32>,
    %c2_77 = arith.constant 2 : index
    %c1_78 = arith.constant 1 : index
    %90 = vector.load %arg5[%c2_77, %c1_78] : memref<20x20xf32, #tpu.memory_space<vmem>>, vector<16x16xf32>
    %c2_79 = arith.constant 2 : index
    %c2_80 = arith.constant 2 : index
    %91 = vector.load %arg5[%c2_79, %c2_80] : memref<20x20xf32, #tpu.memory_space<vmem>>, vector<16x16xf32>
    %cst_81 = arith.constant 2.000000e+00 : f32
    %92 = vector.broadcast %cst_81 : f32 to vector<16x16xf32>
    %93 = arith.mulf %91, %92 : vector<16x16xf32>
    %94 = arith.addf %90, %93 : vector<16x16xf32>
    %c2_82 = arith.constant 2 : index
    %c3_83 = arith.constant 3 : index
    %95 = vector.load %arg5[%c2_82, %c3_83] : memref<20x20xf32, #tpu.memory_space<vmem>>, vector<16x16xf32>
    %96 = arith.addf %94, %95 : vector<16x16xf32>
    %c2_84 = arith.constant 2 : index
    %c2_85 = arith.constant 2 : index
    %97 = vector.load %arg5[%c2_84, %c2_85] : memref<20x20xf32, #tpu.memory_space<vmem>>, vector<16x16xf32>
    tpu.vector_store %arg5[%c2_84, %c2_85], %96 {strides = array<i32>} : memref<20x20xf32, #tpu.memory_space<vmem>>, vector<16x16xf32>,
    %c1_86 = arith.constant 1 : index
    %c2_87 = arith.constant 2 : index
    %98 = vector.load %arg5[%c1_86, %c2_87] : memref<20x20xf32, #tpu.memory_space<vmem>>, vector<16x16xf32>
    %cst_88 = arith.constant -1.000000e+00 : f32
    %99 = vector.broadcast %cst_88 : f32 to vector<16x16xf32>
    %100 = arith.mulf %98, %99 : vector<16x16xf32>
    %c3_89 = arith.constant 3 : index
    %c2_90 = arith.constant 2 : index
    %101 = vector.load %arg5[%c3_89, %c2_90] : memref<20x20xf32, #tpu.memory_space<vmem>>, vector<16x16xf32>
    %102 = arith.addf %100, %101 : vector<16x16xf32>
    %103 = arith.mulf %88, %88 : vector<16x16xf32>
    %104 = arith.mulf %102, %102 : vector<16x16xf32>
    %105 = arith.addf %103, %104 : vector<16x16xf32>
    %106 = math.sqrt %105 : vector<16x16xf32>
    %c0_91 = arith.constant 0 : index
    %c0_92 = arith.constant 0 : index
    %c0_93 = arith.constant 0 : index
    %107 = vector.load %arg2[%c0_91, %c0_92, %c0_93] : memref<1x16x16xf32, #tpu.memory_space<vmem>>, vector<1x16x16xf32>
    %108 = vector.shape_cast %107 : vector<1x16x16xf32> to vector<16x16xf32>
    %109 = vector.shape_cast %106 : vector<16x16xf32> to vector<1x16x16xf32>
    tpu.vector_store %arg2[%c0_91, %c0_92, %c0_93], %109 {strides = array<i32>} : memref<1x16x16xf32, #tpu.memory_space<vmem>>, vector<1x16x16xf32>,
    %110 = vector.shape_cast %106 : vector<16x16xf32> to vector<1x16x16xf32>
    %cst_94 = arith.constant dense<0xFF800000> : vector<1xf32>
    %111 = vector.multi_reduction <maximumf>, %110, %cst_94 [1, 2] : vector<1x16x16xf32> to vector<1xf32>
    %112 = vector.shape_cast %111 : vector<1xf32> to vector<1x1x1xf32>
    %113 = vector.extract %112[0, 0, 0] : f32 from vector<1x1x1xf32>
    %114 = vector.broadcast %113 : f32 to vector<1x1x1xf32>
    %c0_95 = arith.constant 0 : index
    %c0_96 = arith.constant 0 : index
    %c0_97 = arith.constant 0 : index
    %115 = vector.load %arg3[%c0_95, %c0_96, %c0_97] : memref<1x1x1xf32, #tpu.memory_space<vmem>>, vector<1x1x1xf32>
    tpu.vector_store %arg3[%c0_95, %c0_96, %c0_97], %114 {strides = array<i32>} : memref<1x1x1xf32, #tpu.memory_space<vmem>>, vector<1x1x1xf32>,
    return
  }
  func.func @transform_0(%arg0: i32) -> (i32, i32, i32, i32) {
    %c0_i32 = arith.constant 0 : i32
    %c0_i32_0 = arith.constant 0 : i32
    %c0_i32_1 = arith.constant 0 : i32
    %c0_i32_2 = arith.constant 0 : i32
    return %arg0, %c0_i32, %c0_i32_0, %c0_i32_1 : i32, i32, i32, i32
  }
  func.func @transform_1(%arg0: i32) -> (i32, i32, i32) {
    %c0_i32 = arith.constant 0 : i32
    %c0_i32_0 = arith.constant 0 : i32
    %c0_i32_1 = arith.constant 0 : i32
    return %arg0, %c0_i32, %c0_i32_0 : i32, i32, i32
  }
  func.func @transform_2(%arg0: i32) -> (i32, i32, i32) {
    %c0_i32 = arith.constant 0 : i32
    %c0_i32_0 = arith.constant 0 : i32
    %c0_i32_1 = arith.constant 0 : i32
    return %arg0, %c0_i32, %c0_i32_0 : i32, i32, i32
  }
  func.func @transform_3(%arg0: i32) -> (i32, i32, i32) {
    %c0_i32 = arith.constant 0 : i32
    %c0_i32_0 = arith.constant 0 : i32
    %c0_i32_1 = arith.constant 0 : i32
    return %arg0, %c0_i32, %c0_i32_0 : i32, i32, i32
  }
}

</mosaic_0001>

<llo_original>
// kernel: tpu_custom_call.1
$region0: #{tpu_custom_call.1}
  #allocation0 [shape = 'u32[]', space=smem, size = 0x4, offset = 0x4, fixed_abs, tag = 'smem constant byte address 0x4 - core index']
  #allocation1 [shape = 'u32[144,128]{1,0:T(1,128)}', space=vmem, size = 0x12000, scoped, tag = 'internal scratch']
  #allocation2 [shape = 'f32[20,20]{1,0:T(8,128)}', space=vmem, size = 0x3000, scoped, tag = 'scratch operand']
  %s0 = inlined_call_operand.hbm [shape: f32[2,3,16,16], index: 0, kind: input, shape index: {}]
  %s1 = inlined_call_operand.hbm [shape: f32[2,16,16], index: 1, kind: output, shape index: {0}]
  %s2 = inlined_call_operand.vmem [shape: f32[2,1,1], index: 2, kind: output, shape index: {1}]
  %s3 = inlined_call_operand.hbm [shape: s32[2,16,16], index: 3, kind: output, shape index: {2}]
  %4 = xla_tuple %s1, %s2, %s3
  %s5 = sld [smem:[#allocation0]]
  $region57: #{tpu_custom_call.1} parent=0
    _
  %s7 = ssub.s32 1, %s5
  %s8 = scalar_select 0, %s7, %s5
  $region1: #{tpu_custom_call.1} parent=0
    #allocation3 [shape = 'u8[49152]{0}', space=vmem, size = 0xc000, scoped, tag = 'input window, operand 0']
    #allocation4 [shape = 's32[2]{0}', space=sflag, size = 0x8, scoped, tag = 'scoped memory for tpu_custom_call.1']
    #allocation5 [shape = 's32[2]{0}', space=sflag, size = 0x8, scoped, tag = 'scoped memory for tpu_custom_call.1']
    #allocation6 [shape = 'u8[16384]{0}', space=vmem, size = 0x4000, scoped, tag = 'output window, operand 0']
    #allocation7 [shape = 'u8[16384]{0}', space=vmem, size = 0x4000, scoped, tag = 'output window, operand 2']
    #allocation8 [shape = 's32[2]{0}', space=sflag, size = 0x8, scoped, tag = 'scoped memory for tpu_custom_call.1']
    %9 = vsyncpa [#allocation4], 0
    %s10 = scalar_lea.sflag [#allocation4], 1
    %11 = vsyncpa %s10, 0
    %12 = vsyncpa [#allocation5], 0
    %s13 = scalar_lea.sflag [#allocation5], 1
    %14 = vsyncpa %s13, 0
    %15 = vsyncpa [#allocation8], 0
    %s16 = scalar_lea.sflag [#allocation8], 1
    %17 = vsyncpa %s16, 0
    loop: start=0, step=1, limit=4
    $region2: #{tpu_custom_call.1} parent=1 // loop_pre_header
      _
    $region3: #{tpu_custom_call.1} parent=1 // loop_header
      %s19 = sphi 0, %s23
      %p20 = scmp.ge.s32.totalorder %s19, 4
      %s29 = sphi 0, %s31
      %s32 = sphi 0, %s29
      %s33 = sphi 0, %s32
      %s49 = sphi 0, %s33
      %s55 = sphi 0, %s57
      %s58 = sphi 0, %s55
      %s59 = sphi 0, %s58
      %s75 = sphi 0, %s59
      %s81 = sphi 0, %s83
      %s84 = sphi 0, %s81
      %s85 = sphi 0, %s84
      %s101 = sphi 0, %s85
      %s107 = sphi 0, %s109
      %s110 = sphi 0, %s107
      %s111 = sphi 0, %s110
      %s127 = sphi 0, %s111
    $region4: #{tpu_custom_call.1} parent=1 // loop_header_branch
      %22 = sbr.rel (%p20) target = $region8
    $region5: #{tpu_custom_call.1} parent=1 // loop_body
      %s24 = ssub.s32 %s19, 1
      %s25 = ssub.s32 %s19, 2
      %s26 = sadd.s32 %s19, 1
      %s27 = ssub.s32 %s19, %s26
      %p28 = scmp.eq.s32.totalorder %s27, 0
      %s30 = sadd.s32 %s29, 1
      %s31 = scalar_select %p28, %s29, %s30
      %p34 = pneg %p28
      %p35 = scmp.eq.s32.totalorder %s19, 1
      %p36 = por %p34, %p35
      %p37 = scmp.ne.s32.totalorder %s29, %s32
      %p38 = scmp.eq.s32.totalorder %s19, 0
      %p39 = por %p37, %p38
      %p40 = scmp.ne.s32.totalorder %s29, %s32
      %p41 = scmp.eq.s32.totalorder %s24, 1
      %p42 = por %p40, %p41
      %p43 = scmp.ne.s32.totalorder %s32, %s33
      %p44 = scmp.eq.s32.totalorder %s24, 0
      %p45 = por %p43, %p44
      %p46 = scmp.ne.s32.totalorder %s32, %s33
      %p47 = scmp.eq.s32.totalorder %s25, 1
      %p48 = por %p46, %p47
      %p50 = scmp.ne.s32.totalorder %s33, %s49
      %p51 = scmp.eq.s32.totalorder %s25, 0
      %p52 = por %p50, %p51
      %s53 = ssub.s32 %s19, %s26
      %p54 = scmp.eq.s32.totalorder %s53, 0
      %s56 = sadd.s32 %s55, 1
      %s57 = scalar_select %p54, %s55, %s56
      %p60 = pneg %p54
      %p61 = scmp.eq.s32.totalorder %s19, 1
      %p62 = por %p60, %p61
      %p63 = scmp.ne.s32.totalorder %s55, %s58
      %p64 = scmp.eq.s32.totalorder %s19, 0
      %p65 = por %p63, %p64
      %p66 = scmp.ne.s32.totalorder %s55, %s58
      %p67 = scmp.eq.s32.totalorder %s24, 1
      %p68 = por %p66, %p67
      %p69 = scmp.ne.s32.totalorder %s58, %s59
      %p70 = scmp.eq.s32.totalorder %s24, 0
      %p71 = por %p69, %p70
      %p72 = scmp.ne.s32.totalorder %s58, %s59
      %p73 = scmp.eq.s32.totalorder %s25, 1
      %p74 = por %p72, %p73
      %p76 = scmp.ne.s32.totalorder %s59, %s75
      %p77 = scmp.eq.s32.totalorder %s25, 0
      %p78 = por %p76, %p77
      %s79 = ssub.s32 %s19, %s26
      %p80 = scmp.eq.s32.totalorder %s79, 0
      %s82 = sadd.s32 %s81, 1
      %s83 = scalar_select %p80, %s81, %s82
      %p86 = pneg %p80
      %p87 = scmp.eq.s32.totalorder %s19, 1
      %p88 = por %p86, %p87
      %p89 = scmp.ne.s32.totalorder %s81, %s84
      %p90 = scmp.eq.s32.totalorder %s19, 0
      %p91 = por %p89, %p90
      %p92 = scmp.ne.s32.totalorder %s81, %s84
      %p93 = scmp.eq.s32.totalorder %s24, 1
      %p94 = por %p92, %p93
      %p95 = scmp.ne.s32.totalorder %s84, %s85
      %p96 = scmp.eq.s32.totalorder %s24, 0
      %p97 = por %p95, %p96
      %p98 = scmp.ne.s32.totalorder %s84, %s85
      %p99 = scmp.eq.s32.totalorder %s25, 1
      %p100 = por %p98, %p99
      %p102 = scmp.ne.s32.totalorder %s85, %s101
      %p103 = scmp.eq.s32.totalorder %s25, 0
      %p104 = por %p102, %p103
      %s105 = ssub.s32 %s19, %s26
      %p106 = scmp.eq.s32.totalorder %s105, 0
      %s108 = sadd.s32 %s107, 1
      %s109 = scalar_select %p106, %s107, %s108
      %p112 = pneg %p106
      %p113 = scmp.eq.s32.totalorder %s19, 1
      %p114 = por %p112, %p113
      %p115 = scmp.ne.s32.totalorder %s107, %s110
      %p116 = scmp.eq.s32.totalorder %s19, 0
      %p117 = por %p115, %p116
      %p118 = scmp.ne.s32.totalorder %s107, %s110
      %p119 = scmp.eq.s32.totalorder %s24, 1
      %p120 = por %p118, %p119
      %p121 = scmp.ne.s32.totalorder %s110, %s111
      %p122 = scmp.eq.s32.totalorder %s24, 0
      %p123 = por %p121, %p122
      %p124 = scmp.ne.s32.totalorder %s110, %s111
      %p125 = scmp.eq.s32.totalorder %s25, 1
      %p126 = por %p124, %p125
      %p128 = scmp.ne.s32.totalorder %s111, %s127
      %p129 = scmp.eq.s32.totalorder %s25, 0
      %p130 = por %p128, %p129
      %p131 = scmp.le.s32.totalorder 1, %s19
      %p132 = scmp.lt.s32.totalorder %s19, 3
      %p133 = pnand %p131, %p132
      %p134 = pneg %p133
      // Predicated region
      $region9: #{tpu_custom_call.1} parent=5 // pred_check
        _
      $region10: #{tpu_custom_call.1} parent=5 // pred_check_branch
        %136 = sbr.rel (%p133) target = $region12
      $region11: #{tpu_custom_call.1} parent=5 // pred_region
        %s137 = ssub.s32 %s19, 1
      $region12: #{tpu_custom_call.1} parent=5 // pred_fallthru
        _
      %p138 = scmp.lt.s32.totalorder %s19, 2
      // Predicated region
      $region13: #{tpu_custom_call.1} parent=5 // pred_check
        %p139 = pneg %p138
      $region14: #{tpu_custom_call.1} parent=5 // pred_check_branch
        %141 = sbr.rel (%p139) target = $region16
      $region15: #{tpu_custom_call.1} parent=5 // pred_region
        // Predicated region
        $region17: #{tpu_custom_call.1} parent=15 // pred_check
          %p142 = pneg %p39
        $region18: #{tpu_custom_call.1} parent=15 // pred_check_branch
          %144 = sbr.rel (%p142) target = $region20
        $region19: #{tpu_custom_call.1} parent=15 // pred_region
          %s145 = sand.u32 %s29, 1
          %s146 = scalar_lea.sflag [#allocation4], %s145
          %s147 = sand.u32 %s29, 1
          %s148 = smul.addr %s147, 48
          %s149 = scalar_lea.vmem [#allocation3], %s148
          %s151 = ssub.s32 768, 768
          %152 = vsyncadd %s146, %s151
          %s153 = smul.addr %s19, 6
          %s154 = smul.addr %s153, 128
          %s155 = scalar_lea.hbm %s0, %s154
          %s156 = sshll.u32 %s149, 4
          %s157 = int_to_ptr.vmem [resolvable:$true] %s156
          %162 = dma.hbm_to_vmem [thread:$0]  %s155, 768, %s157, %s146, 128, 128, 8
        $region20: #{tpu_custom_call.1} parent=15 // pred_fallthru
          _
      $region16: #{tpu_custom_call.1} parent=5 // pred_fallthru
        _
      %p163 = scmp.le.s32.totalorder 1, %s19
      %p164 = scmp.lt.s32.totalorder %s19, 3
      %p165 = pnand %p163, %p164
      %p166 = pneg %p165
      // Predicated region
      $region21: #{tpu_custom_call.1} parent=5 // pred_check
        _
      $region22: #{tpu_custom_call.1} parent=5 // pred_check_branch
        %168 = sbr.rel (%p165) target = $region24
      $region23: #{tpu_custom_call.1} parent=5 // pred_region
        %s169 = ssub.s32 %s19, 1
        %s170 = sand.u32 %s32, 1
        %s171 = scalar_lea.sflag [#allocation4], %s170
        %s172 = sand.u32 %s32, 1
        %s173 = smul.addr %s172, 48
        %s174 = scalar_lea.vmem [#allocation3], %s173
        // Predicated region
        $region25: #{tpu_custom_call.1} parent=23 // pred_check
          %p175 = pneg %p45
        $region26: #{tpu_custom_call.1} parent=23 // pred_check_branch
          %177 = sbr.rel (%p175) target = $region28
        $region27: #{tpu_custom_call.1} parent=23 // pred_region
          %178 = dma.done %s171, 768
        $region28: #{tpu_custom_call.1} parent=23 // pred_fallthru
          _
        %s179 = sand.u32 %s32, 1
        %s180 = scalar_lea.sflag [#allocation4], %s179
        %s181 = sand.u32 %s32, 1
        %s182 = smul.addr %s181, 48
        %s183 = scalar_lea.vmem [#allocation3], %s182
        %p184 = pneg %p45
        %p185 = pneg %p42
        %p186 = pneg %p71
        %p187 = pneg %p68
        %s188 = sand.u32 %s58, 1
        %s189 = scalar_lea.sflag [#allocation5], %s188
        %s190 = sand.u32 %s58, 1
        %s191 = smul.addr %s190, 16
        %s192 = scalar_lea.vmem [#allocation6], %s191
        %p193 = pneg %p97
        %p194 = pneg %p94
        %p195 = scmp.lt.s32.totalorder %s24, 1
        %s196 = scalar_select %p195, %s24, 1
        %s197 = scalar_lea.vmem %s2, %s196
        %p198 = pneg %p123
        %p199 = pneg %p120
        %s200 = sand.u32 %s110, 1
        %s201 = scalar_lea.sflag [#allocation8], %s200
        %s202 = sand.u32 %s110, 1
        %s203 = smul.addr %s202, 16
        %s204 = scalar_lea.vmem [#allocation7], %s203
        %p205 = scmp.lt.s32.totalorder %s24, 1
        %s206 = scalar_select %p205, %s24, 1
        %s207 = scalar_lea.vmem %s2, %s206
        %vm208 = vcmask 156672
        %209 = vst.msk [vmem:[#allocation2] sm:$0x3] %vm208, 0.0
        %210 = vst.msk [vmem:[#allocation2 + $0x12] sm:$0x3] %vm208, 0.0
        %vm211 = vcmask 15360
        %212 = vst.msk [vmem:[#allocation2 + $0x2] sm:$0xff] %vm211, 0.0
        %213 = vst.msk [vmem:[#allocation2 + $0xa] sm:$0xff] %vm211, 0.0
        %vm214 = vcmask 162960
        %215 = vst.msk [vmem:[#allocation2 + $0x2] sm:$0xff] %vm214, 0.0
        %216 = vst.msk [vmem:[#allocation2 + $0xa] sm:$0xff] %vm214, 0.0
        %v217 = vld [vmem:[%s174] sm:$0xff]
        %v218 = vld [vmem:[%s174 + $0x8] sm:$0xff]
        %s219 = scalar_lea.vmem %s174, 16 [#allocation3]
        %v220 = vld [vmem:[%s219] sm:$0xff]
        %v221 = vld [vmem:[%s219 + $0x8] sm:$0xff]
        %s222 = scalar_lea.vmem %s174, 32 [#allocation3]
        %v223 = vld [vmem:[%s222] sm:$0xff]
        %v224 = vld [vmem:[%s222 + $0x8] sm:$0xff]
        %v225 = vmul.f32 %v217, 31.0
        %v226 = vmul.f32 %v218, 31.0
        %v227 = vround.ne.pseudo %v225
        %v228 = vround.ne.pseudo %v226
        %v229 = vmax.f32 %v227, 0.0
        %v230 = vmax.f32 %v228, 0.0
        %v231 = vmin.f32 %v229, 31.0
        %v232 = vmin.f32 %v230, 31.0
        %v233 = vmul.f32 %v220, 31.0
        %v234 = vmul.f32 %v221, 31.0
        %v235 = vround.ne.pseudo %v233
        %v236 = vround.ne.pseudo %v234
        %v237 = vmax.f32 %v235, 0.0
        %v238 = vmax.f32 %v236, 0.0
        %v239 = vmin.f32 %v237, 31.0
        %v240 = vmin.f32 %v238, 31.0
        %v241 = vmul.f32 %v223, 31.0
        %v242 = vmul.f32 %v224, 31.0
        %v243 = vround.ne.pseudo %v241
        %v244 = vround.ne.pseudo %v242
        %v245 = vmax.f32 %v243, 0.0
        %v246 = vmax.f32 %v244, 0.0
        %v247 = vmin.f32 %v245, 31.0
        %v248 = vmin.f32 %v246, 31.0
        %v249 = vmul.f32 %v231, 1024.0
        %v250 = vmul.f32 %v232, 1024.0
        %v251 = vmul.f32 %v239, 32.0
        %v252 = vmul.f32 %v240, 32.0
        %v253 = vadd.f32 %v249, %v251
        %v254 = vadd.f32 %v250, %v252
        %v255 = vadd.f32 %v253, %v247
        %v256 = vadd.f32 %v254, %v248
        %v257 = vcvt.f32.s32.to.zero.pseudo %v255
        %v258 = vcvt.f32.s32.to.zero.pseudo %v256
        %vm259 = vcmask 130048
        %260 = vst.msk [vmem:[%s204] sm:$0xff] %vm259, %v257
        %261 = vst.msk [vmem:[%s204 + $0x8] sm:$0xff] %vm259, %v258
        %v262 = vmul.f32 %v217, 0.299
        %v263 = vmul.f32 %v218, 0.299
        %v264 = vmul.f32 %v220, 0.587
        %v265 = vmul.f32 %v221, 0.587
        %v266 = vadd.f32 %v262, %v264
        %v267 = vadd.f32 %v263, %v265
        %v268 = vmul.f32 %v223, 0.114
        %v269 = vmul.f32 %v224, 0.114
        %v270 = vadd.f32 %v266, %v268
        %v271 = vadd.f32 %v267, %v269
        %274 = vrot.lane.b32.xlu0 %v270, 2
        %v275 = vpop.permute.xlu0 %274
        %276 = vrot.lane.b32.xlu0 %v271, 2
        %v277 = vpop.permute.xlu0 %276
        %vm280 = vcmask 146448
        %281 = vst.msk [vmem:[#allocation2 + $0x2] sm:$0xff] %vm280, %v275
        %282 = vst.msk [vmem:[#allocation2 + $0xa] sm:$0xff] %vm280, %v277
        %v283 = vld [vmem:[#allocation2 + $0x2] sm:$0xff]
        %v284 = vld [vmem:[#allocation2 + $0xa] sm:$0xff]
        %287 = vrot.lane.b32.xlu0 %v283, 127
        %v288 = vpop.permute.xlu0 %287
        %289 = vrot.lane.b32.xlu0 %v284, 127
        %v290 = vpop.permute.xlu0 %289
        %v293 = vadd.f32 %v283, %v288
        %v294 = vadd.f32 %v284, %v290
        %295 = vrot.lane.b32.xlu0 %v283, 126
        %v296 = vpop.permute.xlu0 %295
        %297 = vrot.lane.b32.xlu0 %v284, 126
        %v298 = vpop.permute.xlu0 %297
        %v301 = vadd.f32 %v293, %v296
        %v302 = vadd.f32 %v294, %v298
        %303 = vrot.lane.b32.xlu0 %v283, 125
        %v304 = vpop.permute.xlu0 %303
        %305 = vrot.lane.b32.xlu0 %v284, 125
        %v306 = vpop.permute.xlu0 %305
        %v309 = vadd.f32 %v301, %v304
        %v310 = vadd.f32 %v302, %v306
        %311 = vrot.lane.b32.xlu0 %v283, 124
        %v312 = vpop.permute.xlu0 %311
        %313 = vrot.lane.b32.xlu0 %v284, 124
        %v314 = vpop.permute.xlu0 %313
        %v317 = vadd.f32 %v309, %v312
        %v318 = vadd.f32 %v310, %v314
        %321 = vrot.lane.b32.xlu0 %v317, 2
        %v322 = vpop.permute.xlu0 %321
        %323 = vrot.lane.b32.xlu0 %v318, 2
        %v324 = vpop.permute.xlu0 %323
        %327 = vst.msk [vmem:[#allocation2 + $0x2] sm:$0xff] %vm280, %v322
        %328 = vst.msk [vmem:[#allocation2 + $0xa] sm:$0xff] %vm280, %v324
        %v329 = vld [vmem:[#allocation2] sm:$0xff]
        %v330 = vld [vmem:[#allocation2 + $0x8] sm:$0xff]
        %v331 = vld [vmem:[#allocation2 + $0x1] sm:$0xff]
        %v332 = vld [vmem:[#allocation2 + $0x9] sm:$0xff]
        %v333 = vadd.f32 %v329, %v331
        %v334 = vadd.f32 %v330, %v332
        %v335 = vld [vmem:[#allocation2 + $0x2] sm:$0xff]
        %v336 = vld [vmem:[#allocation2 + $0xa] sm:$0xff]
        %v337 = vadd.f32 %v333, %v335
        %v338 = vadd.f32 %v334, %v336
        %v339 = vld [vmem:[#allocation2 + $0x3] sm:$0xff]
        %v340 = vld [vmem:[#allocation2 + $0xb] sm:$0xff]
        %v341 = vadd.f32 %v337, %v339
        %v342 = vadd.f32 %v338, %v340
        %v343 = vld [vmem:[#allocation2 + $0x4] sm:$0xff]
        %v344 = vld [vmem:[#allocation2 + $0xc] sm:$0xff]
        %v345 = vadd.f32 %v341, %v343
        %v346 = vadd.f32 %v342, %v344
        %v347 = vmul.f32 %v345, 0.04
        %v348 = vmul.f32 %v346, 0.04
        %349 = vst.msk [vmem:[#allocation2 + $0x2] sm:$0xff] %vm280, %v347
        %350 = vst.msk [vmem:[#allocation2 + $0xa] sm:$0xff] %vm280, %v348
        %v351 = vld [vmem:[#allocation2 + $0x2] sm:$0xff]
        %v352 = vld [vmem:[#allocation2 + $0xa] sm:$0xff]
        %v353 = vmul.f32 %v351, -1.0
        %v354 = vmul.f32 %v352, -1.0
        %357 = vrot.lane.b32.xlu0 %v351, 126
        %v358 = vpop.permute.xlu0 %357
        %359 = vrot.lane.b32.xlu0 %v352, 126
        %v360 = vpop.permute.xlu0 %359
        %v363 = vadd.f32 %v353, %v358
        %v364 = vadd.f32 %v354, %v360
        %367 = vrot.lane.b32.xlu0 %v363, 1
        %v368 = vpop.permute.xlu0 %367
        %369 = vrot.lane.b32.xlu0 %v364, 1
        %v370 = vpop.permute.xlu0 %369
        %373 = vst.msk [vmem:[#allocation2 + $0x2] sm:$0xff] %vm280, %v368
        %374 = vst.msk [vmem:[#allocation2 + $0xa] sm:$0xff] %vm280, %v370
        %v375 = vld [vmem:[#allocation2 + $0x1] sm:$0xff]
        %v376 = vld [vmem:[#allocation2 + $0x9] sm:$0xff]
        %v377 = vld [vmem:[#allocation2 + $0x2] sm:$0xff]
        %v378 = vld [vmem:[#allocation2 + $0xa] sm:$0xff]
        %v379 = vmul.f32 %v377, 2.0
        %v380 = vmul.f32 %v378, 2.0
        %v381 = vadd.f32 %v375, %v379
        %v382 = vadd.f32 %v376, %v380
        %v383 = vld [vmem:[#allocation2 + $0x3] sm:$0xff]
        %v384 = vld [vmem:[#allocation2 + $0xb] sm:$0xff]
        %v385 = vadd.f32 %v381, %v383
        %v386 = vadd.f32 %v382, %v384
        %387 = vst.msk [vmem:[#allocation2 + $0x2] sm:$0xff] %vm280, %v347
        %388 = vst.msk [vmem:[#allocation2 + $0xa] sm:$0xff] %vm280, %v348
        %v389 = vld [vmem:[#allocation2 + $0x2] sm:$0xff]
        %v390 = vld [vmem:[#allocation2 + $0xa] sm:$0xff]
        %v391 = vmul.f32 %v389, 2.0
        %v392 = vmul.f32 %v390, 2.0
        %395 = vrot.lane.b32.xlu0 %v391, 127
        %v396 = vpop.permute.xlu0 %395
        %397 = vrot.lane.b32.xlu0 %v392, 127
        %v398 = vpop.permute.xlu0 %397
        %v401 = vadd.f32 %v389, %v396
        %v402 = vadd.f32 %v390, %v398
        %405 = vrot.lane.b32.xlu0 %v389, 126
        %v406 = vpop.permute.xlu0 %405
        %407 = vrot.lane.b32.xlu0 %v390, 126
        %v408 = vpop.permute.xlu0 %407
        %v411 = vadd.f32 %v401, %v406
        %v412 = vadd.f32 %v402, %v408
        %415 = vrot.lane.b32.xlu0 %v411, 1
        %v416 = vpop.permute.xlu0 %415
        %417 = vrot.lane.b32.xlu0 %v412, 1
        %v418 = vpop.permute.xlu0 %417
        %421 = vst.msk [vmem:[#allocation2 + $0x2] sm:$0xff] %vm280, %v416
        %422 = vst.msk [vmem:[#allocation2 + $0xa] sm:$0xff] %vm280, %v418
        %v423 = vld [vmem:[#allocation2 + $0x1] sm:$0xff]
        %v424 = vld [vmem:[#allocation2 + $0x9] sm:$0xff]
        %v425 = vmul.f32 %v423, -1.0
        %v426 = vmul.f32 %v424, -1.0
        %v427 = vld [vmem:[#allocation2 + $0x3] sm:$0xff]
        %v428 = vld [vmem:[#allocation2 + $0xb] sm:$0xff]
        %v429 = vadd.f32 %v425, %v427
        %v430 = vadd.f32 %v426, %v428
        %v431 = vmul.f32 %v385, %v385
        %v432 = vmul.f32 %v386, %v386
        %v433 = vmul.f32 %v429, %v429
        %v434 = vmul.f32 %v430, %v430
        %v435 = vadd.f32 %v431, %v433
        %v436 = vadd.f32 %v432, %v434
        %v437 = vrsqrt.pop %v435
        %v438 = vmul.f32 %v435, %v437
        %vm439 = vcmp.eq.f32.partialorder %v435, inf
        %v440 = vsel %vm439, %v435, %v438
        %vm441 = vcmp.eq.f32.partialorder %v435, 0.0
        %v442 = vand.u32 %v435, 2147483648
        %v443 = vsel %vm441, %v442, %v440
        %v444 = vrsqrt.pop %v436
        %v445 = vmul.f32 %v436, %v444
        %vm446 = vcmp.eq.f32.partialorder %v436, inf
        %v447 = vsel %vm446, %v436, %v445
        %vm448 = vcmp.eq.f32.partialorder %v436, 0.0
        %v449 = vand.u32 %v436, 2147483648
        %v450 = vsel %vm448, %v449, %v447
        %453 = vrot.lane.b32.xlu0 %v443, 126
        %v454 = vpop.permute.xlu0 %453
        %455 = vrot.lane.b32.xlu0 %v450, 126
        %v456 = vpop.permute.xlu0 %455
        %459 = vst.msk [vmem:[%s192] sm:$0xff] %vm259, %v454
        %460 = vst.msk [vmem:[%s192 + $0x8] sm:$0xff] %vm259, %v456
        %v461 = vsel %vm280, %v443, -inf
        %v462 = vsel %vm280, %v450, -inf
        %v463 = vmax.f32 %v461, %v462
        %464 = vmax.xlane.f32.xlu0 %v463
        %v465 = vpop.xlane.xlu0 %464
        %v466 = vrot.slane %v465, 4
        %v467 = vmax.f32 %v465, %v466
        %v468 = vrot.slane %v467, 2
        %v469 = vmax.f32 %v467, %v468
        %v470 = vrot.slane %v469, 1
        %v471 = vmax.f32 %v469, %v470
        %s472 = vtos %v471
        %v473 = vstv %s472
        %vm474 = vcmask 0
        %475 = vst.msk [vmem:[%s207] sm:$0x1] %vm474, %v473
        %s476 = sand.u32 %s58, 1
        %s477 = scalar_lea.sflag [#allocation5], %s476
        %s478 = sand.u32 %s58, 1
        %s479 = smul.addr %s478, 16
        %s480 = scalar_lea.vmem [#allocation6], %s479
        %p481 = scmp.lt.s32.totalorder %s24, 1
        %s482 = scalar_select %p481, %s24, 1
        %s483 = scalar_lea.vmem %s2, %s482
        %s484 = sand.u32 %s110, 1
        %s485 = scalar_lea.sflag [#allocation8], %s484
        %s486 = sand.u32 %s110, 1
        %s487 = smul.addr %s486, 16
        %s488 = scalar_lea.vmem [#allocation7], %s487
        // Predicated region
        $region29: #{tpu_custom_call.1} parent=23 // pred_check
          %p489 = pneg %p68
        $region30: #{tpu_custom_call.1} parent=23 // pred_check_branch
          %491 = sbr.rel (%p489) target = $region32
        $region31: #{tpu_custom_call.1} parent=23 // pred_region
          %s493 = ssub.s32 256, 256
          %494 = vsyncadd %s477, %s493
          %s495 = smul.addr %s24, 2
          %s496 = smul.addr %s495, 128
          %s497 = scalar_lea.hbm %s1, %s496
          %s498 = sshll.u32 %s480, 4
          %s499 = int_to_ptr.vmem [resolvable:$true] %s498
          %504 = dma.vmem_to_hbm [thread:$0]  %s499, 256, %s497, %s477, 128, 128, 8
        $region32: #{tpu_custom_call.1} parent=23 // pred_fallthru
          _
        // Predicated region
        $region33: #{tpu_custom_call.1} parent=23 // pred_check
          %p505 = pneg %p94
        $region34: #{tpu_custom_call.1} parent=23 // pred_check_branch
          %507 = sbr.rel (%p505) target = $region36
        $region35: #{tpu_custom_call.1} parent=23 // pred_region
          _
        $region36: #{tpu_custom_call.1} parent=23 // pred_fallthru
          _
        // Predicated region
        $region37: #{tpu_custom_call.1} parent=23 // pred_check
          %p508 = pneg %p120
        $region38: #{tpu_custom_call.1} parent=23 // pred_check_branch
          %510 = sbr.rel (%p508) target = $region40
        $region39: #{tpu_custom_call.1} parent=23 // pred_region
          %s512 = ssub.s32 256, 256
          %513 = vsyncadd %s485, %s512
          %s514 = smul.addr %s24, 2
          %s515 = smul.addr %s514, 128
          %s516 = scalar_lea.hbm %s3, %s515
          %s517 = sshll.u32 %s488, 4
          %s518 = int_to_ptr.vmem [resolvable:$true] %s517
          %523 = dma.vmem_to_hbm [thread:$0]  %s518, 256, %s516, %s485, 128, 128, 8
        $region40: #{tpu_custom_call.1} parent=23 // pred_fallthru
          _
      $region24: #{tpu_custom_call.1} parent=5 // pred_fallthru
        _
      %p524 = scmp.le.s32.totalorder 2, %s19
      // Predicated region
      $region41: #{tpu_custom_call.1} parent=5 // pred_check
        %p525 = pneg %p524
      $region42: #{tpu_custom_call.1} parent=5 // pred_check_branch
        %527 = sbr.rel (%p525) target = $region44
      $region43: #{tpu_custom_call.1} parent=5 // pred_region
        %s528 = ssub.s32 %s19, 2
        // Predicated region
        $region45: #{tpu_custom_call.1} parent=43 // pred_check
          %p529 = pneg %p74
        $region46: #{tpu_custom_call.1} parent=43 // pred_check_branch
          %531 = sbr.rel (%p529) target = $region48
        $region47: #{tpu_custom_call.1} parent=43 // pred_region
          %s532 = sand.u32 %s59, 1
          %s533 = scalar_lea.sflag [#allocation5], %s532
          %s534 = sand.u32 %s59, 1
          %s535 = smul.addr %s534, 16
          %s536 = scalar_lea.vmem [#allocation6], %s535
          %537 = dma.done %s533, 256
        $region48: #{tpu_custom_call.1} parent=43 // pred_fallthru
          _
        // Predicated region
        $region49: #{tpu_custom_call.1} parent=43 // pred_check
          %p538 = pneg %p100
        $region50: #{tpu_custom_call.1} parent=43 // pred_check_branch
          %540 = sbr.rel (%p538) target = $region52
        $region51: #{tpu_custom_call.1} parent=43 // pred_region
          %p541 = scmp.lt.s32.totalorder %s25, 1
          %s542 = scalar_select %p541, %s25, 1
          %s543 = scalar_lea.vmem %s2, %s542
        $region52: #{tpu_custom_call.1} parent=43 // pred_fallthru
          _
        // Predicated region
        $region53: #{tpu_custom_call.1} parent=43 // pred_check
          %p544 = pneg %p126
        $region54: #{tpu_custom_call.1} parent=43 // pred_check_branch
          %546 = sbr.rel (%p544) target = $region56
        $region55: #{tpu_custom_call.1} parent=43 // pred_region
          %s547 = sand.u32 %s111, 1
          %s548 = scalar_lea.sflag [#allocation8], %s547
          %s549 = sand.u32 %s111, 1
          %s550 = smul.addr %s549, 16
          %s551 = scalar_lea.vmem [#allocation7], %s550
          %552 = dma.done %s548, 256
        $region56: #{tpu_custom_call.1} parent=43 // pred_fallthru
          _
      $region44: #{tpu_custom_call.1} parent=5 // pred_fallthru
        _
    $region6: #{tpu_custom_call.1} parent=1 // loop_footer
      %s23 = sadd.s32 1, %s19
    $region7: #{tpu_custom_call.1} parent=1 // loop_footer_branch
      %18 = sbr.rel target = $region3
    $region8: #{tpu_custom_call.1} parent=1 // loop_exit
      _
    %553 = vsyncpa [#allocation4], 1
    %s554 = scalar_lea.sflag [#allocation4], 1
    %555 = vsyncpa %s554, 1
    %556 = vsyncpa [#allocation5], 1
    %s557 = scalar_lea.sflag [#allocation5], 1
    %558 = vsyncpa %s557, 1
    %559 = vsyncpa [#allocation8], 1
    %s560 = scalar_lea.sflag [#allocation8], 1
    %561 = vsyncpa %s560, 1

</llo_original>
